<compile_context>
chip_gen: v5e
topology: v5e:2x2
jax: 0.10.0
libtpu: 0.0.40
codegen_flags: <defaults>
</compile_context>

<pallas_src>
import functools

import jax
import jax.numpy as jnp
from jax import lax
from jax.experimental import pallas as pl
from jax.experimental.pallas import tpu as pltpu


def _round_up(x, m):
    return ((x + m - 1) // m) * m


def _choose_tile_rows(n, c, max_tile_rows):
    """Pick a batch-tile size.

    The per-block VMEM footprint is dominated by f32 (T, C_pad) temporaries
    where C_pad = round_up(C, 128) (lane padding), so size T such that one
    such temporary is ~2 MiB; a handful of temps plus the double-buffered
    input then stays well under half of physical VMEM on every generation.
    Small batches get a single 8-aligned tile; large batches a 128-aligned
    tile (keeps the 'none' output blocks lane-aligned).
    """
    # TODO(synk): for very large C (tens of thousands of classes) also tile
    # the class axis with an online (flash-style) log-sum-exp.
    n8 = _round_up(max(n, 1), 8)
    c_pad = _round_up(max(c, 1), 128)
    budget = 2 * 1024 * 1024                       # ~2 MiB f32 per (T, C_pad)
    t = budget // (c_pad * 4)
    t = max(128, min(int(t), int(max_tile_rows)))
    t = max(128, (t // 128) * 128)
    if n8 <= t:
        return n8
    return t


def _vmem_limit_bytes():
    """Generation-aware scoped-VMEM limit: half of physical, capped at 64 MiB."""
    try:
        cap = int(pltpu.get_tpu_info().vmem_capacity_bytes)
    except Exception:
        cap = 64 * 1024 * 1024                     # conservative (v7x-sized)
    return int(min(cap // 2, 64 * 1024 * 1024))


def _focal_loss_kernel(logits_ref, targets_ref, alpha_ref, out_ref, *,
                       gamma, reduction, n_rows, tile_rows, use_alpha):
    pid = pl.program_id(0)

    x = logits_ref[...].astype(jnp.float32)            # (T, C)
    tgt = targets_ref[...]                               # (T, 1) int32
    t, c = x.shape

    # --- Softmax pieces (the only (T, C)-wide work) -------------------------
    m = jnp.max(x, axis=1, keepdims=True)                # (T, 1)   XLU
    z = x - m                                             # (T, C)   VPU
    exp_z = jnp.exp(z)                                    # (T, C)   EUP

    # Target-class boolean mask (row validity handled later, per-row).
    class_ids = lax.broadcasted_iota(jnp.int32, (t, c), 1)
    mask = class_ids == tgt                               # (T, C) bool

    ones_row = jnp.ones((1, c), jnp.float32)
    contract = (((1,), (1,)), ((), ()))                   # contract class axis

    # --- Class-axis reductions on the MXU -> lane-dense (1, T) --------------
    sum_exp = lax.dot_general(ones_row, exp_z, dimension_numbers=contract,
                              preferred_element_type=jnp.float32)      # (1, T)
    z_tgt = lax.dot_general(ones_row, jnp.where(mask, z, 0.0),
                            dimension_numbers=contract,
                            preferred_element_type=jnp.float32)        # (1, T)

    # --- Per-row focal math, all in (1, T) -----------------------------------
    target_logp = z_tgt - jnp.log(sum_exp)                # log p_target
    target_prob = jnp.exp(target_logp)

    # (1 - p)^gamma: small integer gammas as repeated VALU multiplies (no pow);
    # clamp so p slightly above 1 (fp error) cannot produce NaN.
    base = jnp.maximum(1.0 - target_prob, 0.0)
    g = float(gamma)
    if g == 0.0:
        focal_w = jnp.ones_like(base)
    elif g.is_integer() and 1 <= int(g) <= 8:
        focal_w = base
        for _ in range(int(g) - 1):
            focal_w = focal_w * base
    else:
        focal_w = base ** g

    if use_alpha:
        # alpha[target] per row, again via the MXU: alpha(1,C) @ onehot^T.
        alpha_t = lax.dot_general(alpha_ref[...].astype(jnp.float32),
                                  mask.astype(jnp.float32),
                                  dimension_numbers=contract,
                                  preferred_element_type=jnp.float32)  # (1, T)
        focal_w = focal_w * alpha_t

    row_loss = -(focal_w * target_logp)                    # (1, T)

    # Ragged last tile: mask padded rows on the per-row result (and before the
    # partial sum, so garbage/NaN from padded logits never leaks into it).
    col = lax.broadcasted_iota(jnp.int32, (1, t), 1) + pid * tile_rows
    row_loss = jnp.where(col < n_rows, row_loss, 0.0)

    if reduction in ('mean', 'sum'):
        # Per-tile partial sum written into this tile's own (1, 128) block
        # (lane 0 carries the value); final reduce happens in the wrapper.
        partial = jnp.sum(row_loss)
        lane = lax.broadcasted_iota(jnp.int32, (1, out_ref.shape[1]), 1)
        out_ref[...] = jnp.where(lane == 0, partial, 0.0)
    else:
        # Lane-dense per-sample loss: one full-width store per tile.
        out_ref[...] = row_loss


def focal_loss(logits, targets, alpha=None, gamma=2.0, reduction='mean',
               max_tile_rows=4096):
    """Pallas TPU implementation of FocalLoss.forward.

    logits:  (N, C), any float dtype (kernel casts to f32 internally).
    targets: (N,) integer class ids in [0, C).
    alpha:   optional (C,) per-class weights.
    """
    n, c = logits.shape
    targets2d = targets.astype(jnp.int32).reshape(n, 1)
    if alpha is None:
        alpha_arr = jnp.ones((1, c), jnp.float32)          # unused (static skip)
        use_alpha = False
    else:
        alpha_arr = jnp.asarray(alpha, jnp.float32).reshape(1, c)
        use_alpha = True

    tile = _choose_tile_rows(n, c, max_tile_rows)
    num_tiles = -(-n // tile)

    in_specs = [
        pl.BlockSpec((tile, c), lambda i: (i, 0)),   # logits tile
        pl.BlockSpec((tile, 1), lambda i: (i, 0)),   # targets tile
        pl.BlockSpec((1, c), lambda i: (0, 0)),      # alpha (broadcast)
    ]

    if reduction in ('mean', 'sum'):
        out_shape = jax.ShapeDtypeStruct((1, 128 * num_tiles), jnp.float32)
        out_spec = pl.BlockSpec((1, 128), lambda i: (0, i))
    else:
        out_shape = jax.ShapeDtypeStruct((1, num_tiles * tile), jnp.float32)
        out_spec = pl.BlockSpec((1, tile), lambda i: (0, i))

    kernel = functools.partial(
        _focal_loss_kernel,
        gamma=float(gamma), reduction=reduction, n_rows=int(n),
        tile_rows=int(tile), use_alpha=use_alpha)

    out = pl.pallas_call(
        kernel,
        out_shape=out_shape,
        grid=(num_tiles,),
        in_specs=in_specs,
        out_specs=out_spec,
        compiler_params=pltpu.CompilerParams(
            dimension_semantics=("parallel",),
            vmem_limit_bytes=_vmem_limit_bytes()),
    )(logits, targets2d, alpha_arr)

    if reduction == 'mean':
        return jnp.sum(out) / n
    if reduction == 'sum':
        return jnp.sum(out)
    return out[0, :n]


def _focal_loss_ref(logits, targets, alpha=None, gamma=2.0, reduction='mean'):
    """Pure-JAX reference mirroring the PyTorch module."""
    log_probs = jax.nn.log_softmax(logits.astype(jnp.float32), axis=1)
    probs = jnp.exp(log_probs)
    idx = jnp.arange(logits.shape[0])
    target_probs = probs[idx, targets]
    focal_weight = (1.0 - target_probs) ** gamma
    if alpha is not None:
        focal_weight = focal_weight * jnp.asarray(alpha, jnp.float32)[targets]
    loss = -focal_weight * log_probs[idx, targets]
    if reduction == 'mean':
        return loss.mean()
    elif reduction == 'sum':
        return loss.sum()
    return loss


if __name__ == "__main__":
    key = jax.random.PRNGKey(0)
    k1, k2, k3, k4 = jax.random.split(key, 4)

    # Small shapes matching the module: batch of 8 samples, 4 damage classes.
    N, C = 8, 4
    logits = jax.random.normal(k1, (N, C), dtype=jnp.float32)
    targets = jax.random.randint(k2, (N,), 0, C, dtype=jnp.int32)
    alpha = jnp.linspace(0.5, 2.0, C, dtype=jnp.float32)

    checks = []

    # Default module config: alpha=None, gamma=2.0, reduction='mean'.
    checks.append((focal_loss(logits, targets, None, 2.0, 'mean'),
                   _focal_loss_ref(logits, targets, None, 2.0, 'mean')))
    # Alpha-weighted mean / sum / none.
    checks.append((focal_loss(logits, targets, alpha, 2.0, 'mean'),
                   _focal_loss_ref(logits, targets, alpha, 2.0, 'mean')))
    checks.append((focal_loss(logits, targets, alpha, 2.0, 'sum'),
                   _focal_loss_ref(logits, targets, alpha, 2.0, 'sum')))
    checks.append((focal_loss(logits, targets, alpha, 2.0, 'none'),
                   _focal_loss_ref(logits, targets, alpha, 2.0, 'none')))

    # bf16 logits enter the kernel un-cast (kernel casts to f32 internally).
    logits_bf16 = logits.astype(jnp.bfloat16)
    checks.append((focal_loss(logits_bf16, targets, None, 2.0, 'mean'),
                   _focal_loss_ref(logits_bf16, targets, None, 2.0, 'mean')))

    # Multi-tile grid with an uneven last tile: exercises the per-tile partial
    # sums (mean) and the lane-dense 'none' output path with padded rows.
    N2, C2 = 300, 10
    logits2 = jax.random.normal(k3, (N2, C2), dtype=jnp.float32)
    targets2 = jax.random.randint(k4, (N2,), 0, C2, dtype=jnp.int32)
    alpha2 = jnp.linspace(0.25, 1.75, C2, dtype=jnp.float32)
    checks.append((focal_loss(logits2, targets2, alpha2, 2.0, 'mean',
                              max_tile_rows=128),
                   _focal_loss_ref(logits2, targets2, alpha2, 2.0, 'mean')))
    checks.append((focal_loss(logits2, targets2, None, 2.0, 'none',
                              max_tile_rows=128),
                   _focal_loss_ref(logits2, targets2, None, 2.0, 'none')))
    # Single large tile covering the whole (8-padded) batch.
    checks.append((focal_loss(logits2, targets2, alpha2, 2.0, 'sum'),
                   _focal_loss_ref(logits2, targets2, alpha2, 2.0, 'sum')))

    for got, want in checks:
        got = jax.block_until_ready(got)
        assert jnp.allclose(got, want, rtol=1e-4, atol=1e-5), (got, want)

    print("KERNEL_OK")
</pallas_src>

<mosaic_0001>
module attributes {stable_mosaic.version = 11 : i64} {
  func.func @_focal_loss_kernel(%arg0: i32, %arg1: memref<8x4xf32, #tpu.memory_space<vmem>>, %arg2: memref<8x1xi32, #tpu.memory_space<vmem>>, %arg3: memref<1x4xf32, #tpu.memory_space<vmem>>, %arg4: memref<1x128xf32, #tpu.memory_space<vmem>>) attributes {dimension_semantics = [#tpu.dimension_semantics<parallel>], iteration_bounds = array<i64: 1>, scalar_prefetch = 0 : i64, scratch_operands = 0 : i64, tpu.core_type = #tpu.core_type<tc>, window_params = [{transform_indices = @transform_0, window_bounds = array<i64: 8, 4>}, {transform_indices = @transform_1, window_bounds = array<i64: 8, 1>}, {pipeline_mode = #tpu.pipeline_mode<synchronous>, transform_indices = @transform_2, window_bounds = array<i64: 1, 4>}, {transform_indices = @transform_3, window_bounds = array<i64: 1, 128>}]} {
    %c0 = arith.constant 0 : index
    %c0_0 = arith.constant 0 : index
    %0 = vector.load %arg1[%c0, %c0_0] : memref<8x4xf32, #tpu.memory_space<vmem>>, vector<8x4xf32>
    %c0_1 = arith.constant 0 : index
    %c0_2 = arith.constant 0 : index
    %1 = vector.load %arg2[%c0_1, %c0_2] : memref<8x1xi32, #tpu.memory_space<vmem>>, vector<8x1xi32>
    %cst = arith.constant dense<0xFF800000> : vector<8xf32>
    %2 = vector.multi_reduction <maximumf>, %0, %cst [1] : vector<8x4xf32> to vector<8xf32>
    %3 = vector.shape_cast %2 : vector<8xf32> to vector<8x1xf32>
    %4 = vector.broadcast %3 : vector<8x1xf32> to vector<8x4xf32>
    %5 = arith.subf %0, %4 : vector<8x4xf32>
    %6 = math.exp %5 : vector<8x4xf32>
    %7 = tpu.iota {dimensions = array<i32: 1>} : vector<8x4xi32>
    %8 = vector.broadcast %1 : vector<8x1xi32> to vector<8x4xi32>
    %9 = arith.cmpi eq, %7, %8 : vector<8x4xi32>
    %cst_3 = arith.constant 1.000000e+00 : f32
    %10 = vector.broadcast %cst_3 : f32 to vector<1x4xf32>
    %cst_4 = arith.constant dense<0.000000e+00> : vector<1x8xf32>
    %11 = tpu.matmul %10, %6, %cst_4 {dimension_numbers = #tpu.dot_dimension_numbers<[1], [1], [0], [0], [0, 0, 1, 0], [], []>} : vector<1x4xf32>, vector<8x4xf32>, vector<1x8xf32> -> vector<1x8xf32>
    %cst_5 = arith.constant 0.000000e+00 : f32
    %12 = vector.broadcast %cst_5 : f32 to vector<8x4xf32>
    %13 = arith.select %9, %5, %12 : vector<8x4xi1>, vector<8x4xf32>
    %cst_6 = arith.constant dense<0.000000e+00> : vector<1x8xf32>
    %14 = tpu.matmul %10, %13, %cst_6 {dimension_numbers = #tpu.dot_dimension_numbers<[1], [1], [0], [0], [0, 0, 1, 0], [], []>} : vector<1x4xf32>, vector<8x4xf32>, vector<1x8xf32> -> vector<1x8xf32>
    %15 = math.log %11 : vector<1x8xf32>
    %16 = arith.subf %14, %15 : vector<1x8xf32>
    %17 = math.exp %16 : vector<1x8xf32>
    %cst_7 = arith.constant 1.000000e+00 : f32
    %18 = vector.broadcast %cst_7 : f32 to vector<1x8xf32>
    %19 = arith.subf %18, %17 : vector<1x8xf32>
    %cst_8 = arith.constant 0.000000e+00 : f32
    %20 = vector.broadcast %cst_8 : f32 to vector<1x8xf32>
    %21 = arith.maximumf %19, %20 : vector<1x8xf32>
    %22 = arith.mulf %21, %21 : vector<1x8xf32>
    %23 = arith.mulf %22, %16 : vector<1x8xf32>
    %cst_9 = arith.constant 0.000000e+00 : f32
    %24 = vector.broadcast %cst_9 : f32 to vector<1x8xf32>
    %25 = arith.subf %24, %23 : vector<1x8xf32>
    %26 = tpu.iota {dimensions = array<i32: 1>} : vector<1x8xi32>
    %c8_i32 = arith.constant 8 : i32
    %27 = arith.muli %arg0, %c8_i32 : i32
    %28 = vector.broadcast %27 : i32 to vector<1x8xi32>
    %29 = arith.addi %26, %28 : vector<1x8xi32>
    %c8_i32_10 = arith.constant 8 : i32
    %30 = vector.broadcast %c8_i32_10 : i32 to vector<1x8xi32>
    %31 = arith.cmpi slt, %29, %30 : vector<1x8xi32>
    %cst_11 = arith.constant 0.000000e+00 : f32
    %32 = vector.broadcast %cst_11 : f32 to vector<1x8xf32>
    %33 = arith.select %31, %25, %32 : vector<1x8xi1>, vector<1x8xf32>
    %34 = vector.shape_cast %33 : vector<1x8xf32> to vector<1x1x8xf32>
    %cst_12 = arith.constant dense<0.000000e+00> : vector<1xf32>
    %35 = vector.multi_reduction <add>, %34, %cst_12 [1, 2] : vector<1x1x8xf32> to vector<1xf32>
    %36 = vector.shape_cast %35 : vector<1xf32> to vector<1x1x1xf32>
    %37 = vector.extract %36[0, 0, 0] : f32 from vector<1x1x1xf32>
    %38 = tpu.iota {dimensions = array<i32: 1>} : vector<1x128xi32>
    %c0_i32 = arith.constant 0 : i32
    %39 = vector.broadcast %c0_i32 : i32 to vector<1x128xi32>
    %40 = arith.cmpi eq, %38, %39 : vector<1x128xi32>
    %cst_13 = arith.constant 0.000000e+00 : f32
    %41 = vector.broadcast %37 : f32 to vector<1x128xf32>
    %42 = vector.broadcast %cst_13 : f32 to vector<1x128xf32>
    %43 = arith.select %40, %41, %42 : vector<1x128xi1>, vector<1x128xf32>
    %c0_14 = arith.constant 0 : index
    %c0_15 = arith.constant 0 : index
    %44 = vector.load %arg4[%c0_14, %c0_15] : memref<1x128xf32, #tpu.memory_space<vmem>>, vector<1x128xf32>
    tpu.vector_store %arg4[%c0_14, %c0_15], %43 {strides = array<i32>} : memref<1x128xf32, #tpu.memory_space<vmem>>, vector<1x128xf32>,
    return
  }
  func.func @transform_0(%arg0: i32) -> (i32, i32) {
    %c0_i32 = arith.constant 0 : i32
    %c0_i32_0 = arith.constant 0 : i32
    return %arg0, %c0_i32 : i32, i32
  }
  func.func @transform_1(%arg0: i32) -> (i32, i32) {
    %c0_i32 = arith.constant 0 : i32
    %c0_i32_0 = arith.constant 0 : i32
    return %arg0, %c0_i32 : i32, i32
  }
  func.func @transform_2(%arg0: i32) -> (i32, i32) {
    %c0_i32 = arith.constant 0 : i32
    %c0_i32_0 = arith.constant 0 : i32
    %c0_i32_1 = arith.constant 0 : i32
    return %c0_i32, %c0_i32_0 : i32, i32
  }
  func.func @transform_3(%arg0: i32) -> (i32, i32) {
    %c0_i32 = arith.constant 0 : i32
    %c0_i32_0 = arith.constant 0 : i32
    return %c0_i32, %arg0 : i32, i32
  }
}

</mosaic_0001>

<llo_original>
// kernel: tpu_custom_call.1
$region0: #{tpu_custom_call.1}
  #allocation0 [shape = 'u32[]', space=smem, size = 0x4, offset = 0x4, fixed_abs, tag = 'smem constant byte address 0x4 - core index']
  #allocation1 [shape = 'u32[72,128]{1,0:T(1,128)}', space=vmem, size = 0x9000, scoped, tag = 'internal scratch']
  %s0 = inlined_call_operand.vmem [shape: f32[8,4], index: 0, kind: input, shape index: {}]
  %s1 = inlined_call_operand.vmem [shape: s32[8,1], index: 1, kind: input, shape index: {}]
  %s2 = inlined_call_operand.vmem [shape: f32[1,4], index: 2, kind: input, shape index: {}]
  %s3 = inlined_call_operand.hbm [shape: f32[1,128], index: 3, kind: output, shape index: {}]
  %s4 = sld [smem:[#allocation0]]
  $region22: #{tpu_custom_call.1} parent=0
    _
  %s6 = ssub.s32 1, %s4
  %s7 = scalar_select 0, %s6, %s4
  $region1: #{tpu_custom_call.1} parent=0
    #allocation2 [shape = 'u8[512]{0}', space=vmem, size = 0x400, scoped, tag = 'output window, operand 0, single buffered']
    #allocation3 [shape = 's32[1]{0}', space=sflag, size = 0x4, scoped, tag = 'scoped memory for tpu_custom_call.1']
    %8 = vsyncpa [#allocation3], 0
    // Predicated region
    $region2: #{tpu_custom_call.1} parent=1 // pred_check
      _
    $region3: #{tpu_custom_call.1} parent=1 // pred_check_branch
      %10 = sbr.rel (0) target = $region5
    $region4: #{tpu_custom_call.1} parent=1 // pred_region
      _
    $region5: #{tpu_custom_call.1} parent=1 // pred_fallthru
      _
    // Predicated region
    $region6: #{tpu_custom_call.1} parent=1 // pred_check
      _
    $region7: #{tpu_custom_call.1} parent=1 // pred_check_branch
      %12 = sbr.rel (0) target = $region9
    $region8: #{tpu_custom_call.1} parent=1 // pred_region
      _
    $region9: #{tpu_custom_call.1} parent=1 // pred_fallthru
      _
    // Predicated region
    $region10: #{tpu_custom_call.1} parent=1 // pred_check
      _
    $region11: #{tpu_custom_call.1} parent=1 // pred_check_branch
      %14 = sbr.rel (0) target = $region13
    $region12: #{tpu_custom_call.1} parent=1 // pred_region
      _
    $region13: #{tpu_custom_call.1} parent=1 // pred_fallthru
      _
    %v15 = vld [vmem:[%s0] sm:$0xff]
    %v16 = vld [vmem:[%s1] sm:$0xff]
    %vm17 = vcmask 31744
    %v18 = vsel %vm17, %v15, -inf
    %19 = vmax.xlane.f32.xlu0 %v18
    %v20 = vpop.xlane.xlu0 %19
    %v21 = vsub.f32 %v15, %v20
    %v22 = vmul.f32 %v21, 1.442695
    %v23 = vpow.pop %v22
    %v24 = vlaneseq
    %v25 = vand.u32 %v24, 127
    %26 = vset.pattern.permute.xlu0 0
    %27 = vperm.xlu0 %26, %v16
    %v28 = vpop.permute.xlu0 %27
    %vm29 = vcmp.eq.s32.totalorder %v25, %v28
    %v31 = vsel %vm17, 1.0, 0
    %v34 = vsel %vm17, %v23, 0
    %36 = vmatpush.xpose.msra.mxu0 0.0
    %37 = vmatpush.xpose.msra.mxu0 0.0
    %38 = vmatpush.xpose.msra.mxu0 0.0
    %39 = vmatpush.xpose.msra.mxu0 0.0
    %40 = vmatpush.xpose.msra.mxu0 0.0
    %41 = vmatpush.xpose.msra.mxu0 0.0
    %42 = vmatpush.xpose.msra.mxu0 0.0
    %43 = vmatpush.xpose.msra.mxu0 0.0
    %44 = vmatpush.xpose.msra.mxu0 0.0
    %45 = vmatpush.xpose.msra.mxu0 0.0
    %46 = vmatpush.xpose.msra.mxu0 0.0
    %47 = vmatpush.xpose.msra.mxu0 0.0
    %48 = vmatpush.xpose.msra.mxu0 0.0
    %49 = vmatpush.xpose.msra.mxu0 0.0
    %50 = vmatpush.xpose.msra.mxu0 0.0
    %51 = vmatpush.xpose.msra.mxu0 %v34
    %52 = vmatmul.f32.gmra.mxu0 %v31
    %v53 = vpop.f32.mrf.mxu0
    %v54 = vadd.f32 0.0, %v53
    %55 = vdwg.mxu0
    %v56 = vsel %vm29, %v21, 0.0
    %v58 = vsel %vm17, %v56, 0
    %60 = vmatpush.xpose.msra.mxu0 0.0
    %61 = vmatpush.xpose.msra.mxu0 0.0
    %62 = vmatpush.xpose.msra.mxu0 0.0
    %63 = vmatpush.xpose.msra.mxu0 0.0
    %64 = vmatpush.xpose.msra.mxu0 0.0
    %65 = vmatpush.xpose.msra.mxu0 0.0
    %66 = vmatpush.xpose.msra.mxu0 0.0
    %67 = vmatpush.xpose.msra.mxu0 0.0
    %68 = vmatpush.xpose.msra.mxu0 0.0
    %69 = vmatpush.xpose.msra.mxu0 0.0
    %70 = vmatpush.xpose.msra.mxu0 0.0
    %71 = vmatpush.xpose.msra.mxu0 0.0
    %72 = vmatpush.xpose.msra.mxu0 0.0
    %73 = vmatpush.xpose.msra.mxu0 0.0
    %74 = vmatpush.xpose.msra.mxu0 0.0
    %75 = vmatpush.xpose.msra.mxu0 %v58
    %76 = vmatmul.f32.gmra.mxu0 %v31
    %v77 = vpop.f32.mrf.mxu0
    %v78 = vadd.f32 0.0, %v77
    %79 = vdwg.mxu0
    %v80 = vlog2.pop %v54
    %v81 = vmul.f32 %v80, 0.6931472
    %v82 = vsub.f32 %v78, %v81
    %v83 = vmul.f32 %v82, 1.442695
    %v84 = vpow.pop %v83
    %v85 = vsub.f32 1.0, %v84
    %v86 = vmax.f32 %v85, 0.0
    %v87 = vmul.f32 %v86, %v86
    %v88 = vmul.f32 %v87, %v82
    %v89 = vsub.f32 0.0, %v88
    %s90 = smul.u32 0, 8
    %v91 = vstv %s90
    %v92 = vadd.s32 %v25, %v91
    %vm93 = vcmp.lt.s32.totalorder %v92, 8
    %v94 = vsel %vm93, %v89, 0.0
    %vm95 = vcmask 57344
    %v96 = vsel %vm95, %v94, 0.0
    %97 = vadd.xlane.f32.xlu0 %v96
    %v98 = vpop.xlane.xlu0 %97
    %v99 = vrot.slane %v98, 4
    %v100 = vadd.f32 %v98, %v99
    %v101 = vrot.slane %v100, 2
    %v102 = vadd.f32 %v100, %v101
    %v103 = vrot.slane %v102, 1
    %v104 = vadd.f32 %v102, %v103
    %s105 = vtos %v104
    %vm106 = vcmp.eq.s32.totalorder %v25, 0
    %v107 = vstv %s105
    %v108 = vsel %vm106, %v107, 0.0
    %109 = vst [vmem:[#allocation2] sm:$0x1] %v108
    // Predicated region
    $region14: #{tpu_custom_call.1} parent=1 // pred_check
      _
    $region15: #{tpu_custom_call.1} parent=1 // pred_check_branch
      %111 = sbr.rel (0) target = $region17
    $region16: #{tpu_custom_call.1} parent=1 // pred_region
      %113 = vsyncadd [#allocation3], 0
      %s115 = sshll.u32 [#allocation2], 4
      %s116 = int_to_ptr.vmem [resolvable:$true] %s115
      %s117 = sshll.u32 %s3, 4
      %s118 = int_to_ptr.hbm [resolvable:$true] %s117
      %120 = dma.vmem_to_hbm [thread:$0]  %s116, 16, %s118, [#allocation3]
    $region17: #{tpu_custom_call.1} parent=1 // pred_fallthru
      _
    // Predicated region
    $region18: #{tpu_custom_call.1} parent=1 // pred_check
      _
    $region19: #{tpu_custom_call.1} parent=1 // pred_check_branch
      %122 = sbr.rel (0) target = $region21
    $region20: #{tpu_custom_call.1} parent=1 // pred_region
      %124 = dma.done [#allocation3], 16
    $region21: #{tpu_custom_call.1} parent=1 // pred_fallthru
      _
    %125 = vsyncpa [#allocation3], 1

</llo_original>
